<compile_context>
chip_gen: v7x
topology: tpu7x:2x2x1
jax: 0.10.0
libtpu: 0.0.40
codegen_flags: <defaults>
</compile_context>

<pallas_src>
import jax
import jax.numpy as jnp
from jax.experimental import pallas as pl
from jax.experimental.pallas import tpu as pltpu

PATCHES_NUM = 12
IN_DIM = PATCHES_NUM * 4          # 48
H1, H2, H3, H4 = 256, 256, 256, 128
OUT = 4
OUT_PAD = 8                       # small, legal (block dim == full array dim)
NEG = -1e30                       # bias for padded (dummy) classes; must stay f32
TM_CAP = 2048                     # batch-tile cap (multiple of 8)


def _round_up(v, m):
    return ((v + m - 1) // m) * m


def _mlp_logsoftmax_kernel(x_ref,
                           w1_ref, b1_ref,
                           w2_ref, b2_ref,
                           w3_ref, b3_ref,
                           w4_ref, b4_ref,
                           w5_ref, b5_ref,
                           o_ref):
    # bf16 MXU inputs, f32 accumulation; bias add / ReLU / log_softmax in f32.
    h = x_ref[...].astype(jnp.bfloat16)                                  # (TM, 48)
    h = jnp.dot(h, w1_ref[...], preferred_element_type=jnp.float32) + b1_ref[...]
    h = jnp.maximum(h, 0.0).astype(jnp.bfloat16)
    h = jnp.dot(h, w2_ref[...], preferred_element_type=jnp.float32) + b2_ref[...]
    h = jnp.maximum(h, 0.0).astype(jnp.bfloat16)
    h = jnp.dot(h, w3_ref[...], preferred_element_type=jnp.float32) + b3_ref[...]
    h = jnp.maximum(h, 0.0).astype(jnp.bfloat16)
    h = jnp.dot(h, w4_ref[...], preferred_element_type=jnp.float32) + b4_ref[...]
    h = jnp.maximum(h, 0.0).astype(jnp.bfloat16)
    logits = jnp.dot(h, w5_ref[...], preferred_element_type=jnp.float32) + b5_ref[...]

    # Numerically-stable log_softmax over OUT_PAD lanes.  Padded classes sit at
    # ~NEG (-1e30), so exp(shifted) == 0 for them and the reduction equals the
    # 4-class one.
    m = jnp.max(logits, axis=-1, keepdims=True)
    shifted = logits - m
    lse = jnp.log(jnp.sum(jnp.exp(shifted), axis=-1, keepdims=True))
    o_ref[...] = (shifted - lse).astype(o_ref.dtype)


def imagewise_forward(x, params):
    """x: (B, patches_num, 4) float32. Returns (B, 4) log-probabilities."""
    B = x.shape[0]
    x_flat = x.reshape(B, -1).astype(jnp.float32)      # view-like reshape in plain JAX
    assert x_flat.shape[1] == IN_DIM

    (w1, b1), (w2, b2), (w3, b3), (w4, b4), (w5, b5) = params

    # Pad the class dim (4 -> 8).  Dummy classes get a -1e30 bias so they never
    # affect the softmax.  Weights are tiny; padding/casting them is negligible.
    w5p = jnp.pad(w5, ((0, 0), (0, OUT_PAD - OUT)))
    b5p = jnp.pad(b5, ((0, 0), (0, OUT_PAD - OUT)), constant_values=NEG)

    # bf16 MXU weight inputs (accumulation stays f32 inside the kernel); biases f32.
    w1b = w1.astype(jnp.bfloat16)
    w2b = w2.astype(jnp.bfloat16)
    w3b = w3.astype(jnp.bfloat16)
    w4b = w4.astype(jnp.bfloat16)
    w5b = w5p.astype(jnp.bfloat16)

    # Batch tile: multiple of 8, ~B/2 so there are >= 2 tiles for mid/large B
    # (v7x has 2 TensorCores), capped so per-tile VMEM stays a few MiB.
    TM = min(TM_CAP, _round_up(max(1, (B + 1) // 2), 8))
    n_tiles = pl.cdiv(B, TM)
    B_pad = n_tiles * TM
    if B_pad != B:
        # Keep the explicit pad: padded rows are zeros -> logits are finite, no NaN
        # ever flows through exp/log in lanes/rows that get sliced off.
        x_flat = jnp.pad(x_flat, ((0, B_pad - B), (0, 0)))

    const2d = lambda i: (0, 0)                          # weights/biases: VMEM-resident
    in_specs = [
        pl.BlockSpec((TM, IN_DIM), lambda i: (i, 0)),   # x tile, pipelined over batch
        pl.BlockSpec((IN_DIM, H1), const2d),  pl.BlockSpec((1, H1), const2d),
        pl.BlockSpec((H1, H2), const2d),      pl.BlockSpec((1, H2), const2d),
        pl.BlockSpec((H2, H3), const2d),      pl.BlockSpec((1, H3), const2d),
        pl.BlockSpec((H3, H4), const2d),      pl.BlockSpec((1, H4), const2d),
        pl.BlockSpec((H4, OUT_PAD), const2d), pl.BlockSpec((1, OUT_PAD), const2d),
    ]
    out_specs = pl.BlockSpec((TM, OUT_PAD), lambda i: (i, 0))

    flops_per_row = 2 * (IN_DIM * H1 + H1 * H2 + H2 * H3 + H3 * H4 + H4 * OUT)
    weight_bytes = 2 * (IN_DIM * H1 + H1 * H2 + H2 * H3 + H3 * H4 + H4 * OUT_PAD) \
        + 4 * (H1 + H2 + H3 + H4 + OUT_PAD)
    cost = pl.CostEstimate(
        flops=B_pad * flops_per_row,
        transcendentals=B_pad * (OUT_PAD + 1),
        bytes_accessed=B_pad * 4 * (IN_DIM + OUT_PAD) + weight_bytes,
    )

    out = pl.pallas_call(
        _mlp_logsoftmax_kernel,
        out_shape=jax.ShapeDtypeStruct((B_pad, OUT_PAD), jnp.float32),
        grid=(n_tiles,),
        in_specs=in_specs,
        out_specs=out_specs,
        compiler_params=pltpu.CompilerParams(
            dimension_semantics=("parallel",),          # shard batch tiles on v7x 2 TCs
            vmem_limit_bytes=32 * 1024 * 1024,          # headroom for TM up to 2048
        ),
        cost_estimate=cost,
    )(x_flat, w1b, b1, w2b, b2, w3b, b3, w4b, b4, w5b, b5p)

    return out[:B, :OUT]


def _reference_forward(x, params):
    """Pure-JAX f32 reference (for correctness check only)."""
    h = x.reshape(x.shape[0], -1).astype(jnp.float32)
    for i, (w, b) in enumerate(params):
        h = h @ w + b
        if i < len(params) - 1:
            h = jnp.maximum(h, 0.0)
    return jax.nn.log_softmax(h, axis=-1)


def init_params(key):
    """Deterministic init matching BaseNetwork.initialize_weights():
    Linear weights ~ N(0, 0.01), biases = 0. Weights stored (in, out)."""
    dims = [(IN_DIM, H1), (H1, H2), (H2, H3), (H3, H4), (H4, OUT)]
    params = []
    for (din, dout) in dims:
        key, sub = jax.random.split(key)
        w = 0.01 * jax.random.normal(sub, (din, dout), dtype=jnp.float32)
        b = jnp.zeros((1, dout), dtype=jnp.float32)
        params.append((w, b))
    return params


if __name__ == "__main__":
    key = jax.random.PRNGKey(0)
    k_x, k_x2, k_p = jax.random.split(key, 3)

    params = init_params(k_p)

    # Small batch (single tile, padded 2 -> 8 rows).
    B = 2
    x = jax.random.normal(k_x, (B, PATCHES_NUM, 4), dtype=jnp.float32)
    out = jax.block_until_ready(imagewise_forward(x, params))
    assert out.shape == (B, OUT)
    row_sums = jnp.sum(jnp.exp(out), axis=-1)
    assert bool(jnp.all(jnp.abs(row_sums - 1.0) < 1e-4))
    ref = _reference_forward(x, params)
    assert bool(jnp.all(jnp.abs(out - ref) < 5e-2))

    # Larger, non-multiple-of-8 batch: exercises multi-tile grid + batch padding.
    B2 = 37
    x2 = jax.random.normal(k_x2, (B2, PATCHES_NUM, 4), dtype=jnp.float32)
    out2 = jax.block_until_ready(imagewise_forward(x2, params))
    assert out2.shape == (B2, OUT)
    row_sums2 = jnp.sum(jnp.exp(out2), axis=-1)
    assert bool(jnp.all(jnp.abs(row_sums2 - 1.0) < 1e-4))
    ref2 = _reference_forward(x2, params)
    assert bool(jnp.all(jnp.abs(out2 - ref2) < 5e-2))

    print("KERNEL_OK")
</pallas_src>

<mosaic_0001>
module attributes {stable_mosaic.version = 11 : i64} {
  func.func @_mlp_logsoftmax_kernel(%arg0: i32, %arg1: memref<8x48xf32, #tpu.memory_space<vmem>>, %arg2: memref<48x256xbf16, #tpu.memory_space<vmem>>, %arg3: memref<1x256xf32, #tpu.memory_space<vmem>>, %arg4: memref<256x256xbf16, #tpu.memory_space<vmem>>, %arg5: memref<1x256xf32, #tpu.memory_space<vmem>>, %arg6: memref<256x256xbf16, #tpu.memory_space<vmem>>, %arg7: memref<1x256xf32, #tpu.memory_space<vmem>>, %arg8: memref<256x128xbf16, #tpu.memory_space<vmem>>, %arg9: memref<1x128xf32, #tpu.memory_space<vmem>>, %arg10: memref<128x8xbf16, #tpu.memory_space<vmem>>, %arg11: memref<1x8xf32, #tpu.memory_space<vmem>>, %arg12: memref<8x8xf32, #tpu.memory_space<vmem>>) attributes {dimension_semantics = [#tpu.dimension_semantics<parallel>], iteration_bounds = array<i64: 1>, scalar_prefetch = 0 : i64, scratch_operands = 0 : i64, tpu.core_type = #tpu.core_type<tc>, window_params = [{transform_indices = @transform_0, window_bounds = array<i64: 8, 48>}, {pipeline_mode = #tpu.pipeline_mode<synchronous>, transform_indices = @transform_1, window_bounds = array<i64: 48, 256>}, {pipeline_mode = #tpu.pipeline_mode<synchronous>, transform_indices = @transform_2, window_bounds = array<i64: 1, 256>}, {pipeline_mode = #tpu.pipeline_mode<synchronous>, transform_indices = @transform_3, window_bounds = array<i64: 256, 256>}, {pipeline_mode = #tpu.pipeline_mode<synchronous>, transform_indices = @transform_4, window_bounds = array<i64: 1, 256>}, {pipeline_mode = #tpu.pipeline_mode<synchronous>, transform_indices = @transform_5, window_bounds = array<i64: 256, 256>}, {pipeline_mode = #tpu.pipeline_mode<synchronous>, transform_indices = @transform_6, window_bounds = array<i64: 1, 256>}, {pipeline_mode = #tpu.pipeline_mode<synchronous>, transform_indices = @transform_7, window_bounds = array<i64: 256, 128>}, {pipeline_mode = #tpu.pipeline_mode<synchronous>, transform_indices = @transform_8, window_bounds = array<i64: 1, 128>}, {pipeline_mode = #tpu.pipeline_mode<synchronous>, transform_indices = @transform_9, window_bounds = array<i64: 128, 8>}, {pipeline_mode = #tpu.pipeline_mode<synchronous>, transform_indices = @transform_10, window_bounds = array<i64: 1, 8>}, {transform_indices = @transform_11, window_bounds = array<i64: 8, 8>}]} {
    %c0 = arith.constant 0 : index
    %c0_0 = arith.constant 0 : index
    %0 = vector.load %arg1[%c0, %c0_0] : memref<8x48xf32, #tpu.memory_space<vmem>>, vector<8x48xf32>
    %1 = arith.truncf %0 : vector<8x48xf32> to vector<8x48xbf16>
    %c0_1 = arith.constant 0 : index
    %c0_2 = arith.constant 0 : index
    %2 = vector.load %arg2[%c0_1, %c0_2] : memref<48x256xbf16, #tpu.memory_space<vmem>>, vector<48x256xbf16>
    %cst = arith.constant dense<0.000000e+00> : vector<8x256xf32>
    %3 = tpu.matmul %1, %2, %cst {dimension_numbers = #tpu.dot_dimension_numbers<[1], [0], [0], [1], [0, 0, 1, 1], [], []>} : vector<8x48xbf16>, vector<48x256xbf16>, vector<8x256xf32> -> vector<8x256xf32>
    %c0_3 = arith.constant 0 : index
    %c0_4 = arith.constant 0 : index
    %4 = vector.load %arg3[%c0_3, %c0_4] : memref<1x256xf32, #tpu.memory_space<vmem>>, vector<1x256xf32>
    %5 = vector.broadcast %4 : vector<1x256xf32> to vector<8x256xf32>
    %6 = arith.addf %3, %5 : vector<8x256xf32>
    %cst_5 = arith.constant 0.000000e+00 : f32
    %7 = vector.broadcast %cst_5 : f32 to vector<8x256xf32>
    %8 = arith.maximumf %6, %7 : vector<8x256xf32>
    %9 = arith.truncf %8 : vector<8x256xf32> to vector<8x256xbf16>
    %c0_6 = arith.constant 0 : index
    %c0_7 = arith.constant 0 : index
    %10 = vector.load %arg4[%c0_6, %c0_7] : memref<256x256xbf16, #tpu.memory_space<vmem>>, vector<256x256xbf16>
    %cst_8 = arith.constant dense<0.000000e+00> : vector<8x256xf32>
    %11 = tpu.matmul %9, %10, %cst_8 {dimension_numbers = #tpu.dot_dimension_numbers<[1], [0], [0], [1], [0, 0, 1, 1], [], []>} : vector<8x256xbf16>, vector<256x256xbf16>, vector<8x256xf32> -> vector<8x256xf32>
    %c0_9 = arith.constant 0 : index
    %c0_10 = arith.constant 0 : index
    %12 = vector.load %arg5[%c0_9, %c0_10] : memref<1x256xf32, #tpu.memory_space<vmem>>, vector<1x256xf32>
    %13 = vector.broadcast %12 : vector<1x256xf32> to vector<8x256xf32>
    %14 = arith.addf %11, %13 : vector<8x256xf32>
    %cst_11 = arith.constant 0.000000e+00 : f32
    %15 = vector.broadcast %cst_11 : f32 to vector<8x256xf32>
    %16 = arith.maximumf %14, %15 : vector<8x256xf32>
    %17 = arith.truncf %16 : vector<8x256xf32> to vector<8x256xbf16>
    %c0_12 = arith.constant 0 : index
    %c0_13 = arith.constant 0 : index
    %18 = vector.load %arg6[%c0_12, %c0_13] : memref<256x256xbf16, #tpu.memory_space<vmem>>, vector<256x256xbf16>
    %cst_14 = arith.constant dense<0.000000e+00> : vector<8x256xf32>
    %19 = tpu.matmul %17, %18, %cst_14 {dimension_numbers = #tpu.dot_dimension_numbers<[1], [0], [0], [1], [0, 0, 1, 1], [], []>} : vector<8x256xbf16>, vector<256x256xbf16>, vector<8x256xf32> -> vector<8x256xf32>
    %c0_15 = arith.constant 0 : index
    %c0_16 = arith.constant 0 : index
    %20 = vector.load %arg7[%c0_15, %c0_16] : memref<1x256xf32, #tpu.memory_space<vmem>>, vector<1x256xf32>
    %21 = vector.broadcast %20 : vector<1x256xf32> to vector<8x256xf32>
    %22 = arith.addf %19, %21 : vector<8x256xf32>
    %cst_17 = arith.constant 0.000000e+00 : f32
    %23 = vector.broadcast %cst_17 : f32 to vector<8x256xf32>
    %24 = arith.maximumf %22, %23 : vector<8x256xf32>
    %25 = arith.truncf %24 : vector<8x256xf32> to vector<8x256xbf16>
    %c0_18 = arith.constant 0 : index
    %c0_19 = arith.constant 0 : index
    %26 = vector.load %arg8[%c0_18, %c0_19] : memref<256x128xbf16, #tpu.memory_space<vmem>>, vector<256x128xbf16>
    %cst_20 = arith.constant dense<0.000000e+00> : vector<8x128xf32>
    %27 = tpu.matmul %25, %26, %cst_20 {dimension_numbers = #tpu.dot_dimension_numbers<[1], [0], [0], [1], [0, 0, 1, 1], [], []>} : vector<8x256xbf16>, vector<256x128xbf16>, vector<8x128xf32> -> vector<8x128xf32>
    %c0_21 = arith.constant 0 : index
    %c0_22 = arith.constant 0 : index
    %28 = vector.load %arg9[%c0_21, %c0_22] : memref<1x128xf32, #tpu.memory_space<vmem>>, vector<1x128xf32>
    %29 = vector.broadcast %28 : vector<1x128xf32> to vector<8x128xf32>
    %30 = arith.addf %27, %29 : vector<8x128xf32>
    %cst_23 = arith.constant 0.000000e+00 : f32
    %31 = vector.broadcast %cst_23 : f32 to vector<8x128xf32>
    %32 = arith.maximumf %30, %31 : vector<8x128xf32>
    %33 = arith.truncf %32 : vector<8x128xf32> to vector<8x128xbf16>
    %c0_24 = arith.constant 0 : index
    %c0_25 = arith.constant 0 : index
    %34 = vector.load %arg10[%c0_24, %c0_25] : memref<128x8xbf16, #tpu.memory_space<vmem>>, vector<128x8xbf16>
    %cst_26 = arith.constant dense<0.000000e+00> : vector<8x8xf32>
    %35 = tpu.matmul %33, %34, %cst_26 {dimension_numbers = #tpu.dot_dimension_numbers<[1], [0], [0], [1], [0, 0, 1, 1], [], []>} : vector<8x128xbf16>, vector<128x8xbf16>, vector<8x8xf32> -> vector<8x8xf32>
    %c0_27 = arith.constant 0 : index
    %c0_28 = arith.constant 0 : index
    %36 = vector.load %arg11[%c0_27, %c0_28] : memref<1x8xf32, #tpu.memory_space<vmem>>, vector<1x8xf32>
    %37 = vector.broadcast %36 : vector<1x8xf32> to vector<8x8xf32>
    %38 = arith.addf %35, %37 : vector<8x8xf32>
    %cst_29 = arith.constant dense<0xFF800000> : vector<8xf32>
    %39 = vector.multi_reduction <maximumf>, %38, %cst_29 [1] : vector<8x8xf32> to vector<8xf32>
    %40 = vector.shape_cast %39 : vector<8xf32> to vector<8x1xf32>
    %41 = vector.broadcast %40 : vector<8x1xf32> to vector<8x8xf32>
    %42 = arith.subf %38, %41 : vector<8x8xf32>
    %43 = math.exp %42 : vector<8x8xf32>
    %cst_30 = arith.constant dense<0.000000e+00> : vector<8xf32>
    %44 = vector.multi_reduction <add>, %43, %cst_30 [1] : vector<8x8xf32> to vector<8xf32>
    %45 = vector.shape_cast %44 : vector<8xf32> to vector<8x1xf32>
    %46 = math.log %45 : vector<8x1xf32>
    %47 = vector.broadcast %46 : vector<8x1xf32> to vector<8x8xf32>
    %48 = arith.subf %42, %47 : vector<8x8xf32>
    %c0_31 = arith.constant 0 : index
    %c0_32 = arith.constant 0 : index
    %49 = vector.load %arg12[%c0_31, %c0_32] : memref<8x8xf32, #tpu.memory_space<vmem>>, vector<8x8xf32>
    tpu.vector_store %arg12[%c0_31, %c0_32], %48 {strides = array<i32>} : memref<8x8xf32, #tpu.memory_space<vmem>>, vector<8x8xf32>,
    return
  }
  func.func @transform_0(%arg0: i32) -> (i32, i32) {
    %c0_i32 = arith.constant 0 : i32
    %c0_i32_0 = arith.constant 0 : i32
    return %arg0, %c0_i32 : i32, i32
  }
  func.func @transform_1(%arg0: i32) -> (i32, i32) {
    %c0_i32 = arith.constant 0 : i32
    %c0_i32_0 = arith.constant 0 : i32
    %c0_i32_1 = arith.constant 0 : i32
    return %c0_i32, %c0_i32_0 : i32, i32
  }
  func.func @transform_2(%arg0: i32) -> (i32, i32) {
    %c0_i32 = arith.constant 0 : i32
    %c0_i32_0 = arith.constant 0 : i32
    %c0_i32_1 = arith.constant 0 : i32
    return %c0_i32, %c0_i32_0 : i32, i32
  }
  func.func @transform_3(%arg0: i32) -> (i32, i32) {
    %c0_i32 = arith.constant 0 : i32
    %c0_i32_0 = arith.constant 0 : i32
    %c0_i32_1 = arith.constant 0 : i32
    return %c0_i32, %c0_i32_0 : i32, i32
  }
  func.func @transform_4(%arg0: i32) -> (i32, i32) {
    %c0_i32 = arith.constant 0 : i32
    %c0_i32_0 = arith.constant 0 : i32
    %c0_i32_1 = arith.constant 0 : i32
    return %c0_i32, %c0_i32_0 : i32, i32
  }
  func.func @transform_5(%arg0: i32) -> (i32, i32) {
    %c0_i32 = arith.constant 0 : i32
    %c0_i32_0 = arith.constant 0 : i32
    %c0_i32_1 = arith.constant 0 : i32
    return %c0_i32, %c0_i32_0 : i32, i32
  }
  func.func @transform_6(%arg0: i32) -> (i32, i32) {
    %c0_i32 = arith.constant 0 : i32
    %c0_i32_0 = arith.constant 0 : i32
    %c0_i32_1 = arith.constant 0 : i32
    return %c0_i32, %c0_i32_0 : i32, i32
  }
  func.func @transform_7(%arg0: i32) -> (i32, i32) {
    %c0_i32 = arith.constant 0 : i32
    %c0_i32_0 = arith.constant 0 : i32
    %c0_i32_1 = arith.constant 0 : i32
    return %c0_i32, %c0_i32_0 : i32, i32
  }
  func.func @transform_8(%arg0: i32) -> (i32, i32) {
    %c0_i32 = arith.constant 0 : i32
    %c0_i32_0 = arith.constant 0 : i32
    %c0_i32_1 = arith.constant 0 : i32
    return %c0_i32, %c0_i32_0 : i32, i32
  }
  func.func @transform_9(%arg0: i32) -> (i32, i32) {
    %c0_i32 = arith.constant 0 : i32
    %c0_i32_0 = arith.constant 0 : i32
    %c0_i32_1 = arith.constant 0 : i32
    return %c0_i32, %c0_i32_0 : i32, i32
  }
  func.func @transform_10(%arg0: i32) -> (i32, i32) {
    %c0_i32 = arith.constant 0 : i32
    %c0_i32_0 = arith.constant 0 : i32
    %c0_i32_1 = arith.constant 0 : i32
    return %c0_i32, %c0_i32_0 : i32, i32
  }
  func.func @transform_11(%arg0: i32) -> (i32, i32) {
    %c0_i32 = arith.constant 0 : i32
    %c0_i32_0 = arith.constant 0 : i32
    return %arg0, %c0_i32 : i32, i32
  }
}

</mosaic_0001>

<llo_original>
// kernel: tpu_custom_call.1
$region0: #{tpu_custom_call.1}
  #allocation0 [shape = 'u32[]', space=smem, size = 0x4, offset = 0x4, fixed_abs, tag = 'smem constant byte address 0x4 - core index']
  #allocation1 [shape = 'u32[144,128]{1,0:T(1,128)}', space=vmem, size = 0x12000, scoped, tag = 'internal scratch']
  %s0 = inlined_call_operand.vmem [shape: f32[8,48], index: 0, kind: input, shape index: {}]
  %s1 = inlined_call_operand.vmem [shape: bf16[48,256], index: 1, kind: input, shape index: {}]
  %s2 = inlined_call_operand.vmem [shape: f32[1,256], index: 2, kind: input, shape index: {}]
  %s3 = inlined_call_operand.hbm [shape: bf16[256,256], index: 3, kind: input, shape index: {}]
  %s4 = inlined_call_operand.vmem [shape: f32[1,256], index: 4, kind: input, shape index: {}]
  %s5 = inlined_call_operand.hbm [shape: bf16[256,256], index: 5, kind: input, shape index: {}]
  %s6 = inlined_call_operand.vmem [shape: f32[1,256], index: 6, kind: input, shape index: {}]
  %s7 = inlined_call_operand.hbm [shape: bf16[256,128], index: 7, kind: input, shape index: {}]
  %s8 = inlined_call_operand.vmem [shape: f32[1,128], index: 8, kind: input, shape index: {}]
  %s9 = inlined_call_operand.vmem [shape: bf16[128,8], index: 9, kind: input, shape index: {}]
  %s10 = inlined_call_operand.vmem [shape: f32[1,8], index: 10, kind: input, shape index: {}]
  %s11 = inlined_call_operand.hbm [shape: f32[8,8], index: 11, kind: output, shape index: {}]
  %s12 = sld [smem:[#allocation0]]
  $region66: #{tpu_custom_call.1} parent=0
    _
  %s14 = ssub.s32 1, %s12
  %s15 = scalar_select 0, %s14, %s12
  $region1: #{tpu_custom_call.1} parent=0
    #allocation2 [shape = 'u8[131072]{0}', space=vmem, size = 0x20000, scoped, tag = 'input window, operand 3, single buffered']
    #allocation3 [shape = 's32[1]{0}', space=sflag, size = 0x4, scoped, tag = 'scoped memory for tpu_custom_call.1']
    #allocation4 [shape = 's32[1]{0}', space=sflag, size = 0x4, scoped, tag = 'scoped memory for tpu_custom_call.1']
    #allocation5 [shape = 'u8[131072]{0}', space=vmem, size = 0x20000, scoped, tag = 'input window, operand 5, single buffered']
    #allocation6 [shape = 's32[1]{0}', space=sflag, size = 0x4, scoped, tag = 'scoped memory for tpu_custom_call.1']
    #allocation7 [shape = 'u8[65536]{0}', space=vmem, size = 0x10000, scoped, tag = 'input window, operand 7, single buffered']
    #allocation8 [shape = 'u8[4096]{0}', space=vmem, size = 0x1000, scoped, tag = 'output window, operand 0, single buffered']
    %16 = vsyncpa [#allocation3], 0
    %17 = vsyncpa [#allocation6], 0
    %18 = vsyncpa [#allocation4], 0
    // Predicated region
    $region2: #{tpu_custom_call.1} parent=1 // pred_check
      _
    $region3: #{tpu_custom_call.1} parent=1 // pred_check_branch
      %20 = sbr.rel (0) target = $region5
    $region4: #{tpu_custom_call.1} parent=1 // pred_region
      _
    $region5: #{tpu_custom_call.1} parent=1 // pred_fallthru
      _
    // Predicated region
    $region6: #{tpu_custom_call.1} parent=1 // pred_check
      _
    $region7: #{tpu_custom_call.1} parent=1 // pred_check_branch
      %22 = sbr.rel (0) target = $region9
    $region8: #{tpu_custom_call.1} parent=1 // pred_region
      _
    $region9: #{tpu_custom_call.1} parent=1 // pred_fallthru
      _
    // Predicated region
    $region10: #{tpu_custom_call.1} parent=1 // pred_check
      _
    $region11: #{tpu_custom_call.1} parent=1 // pred_check_branch
      %24 = sbr.rel (0) target = $region13
    $region12: #{tpu_custom_call.1} parent=1 // pred_region
      _
    $region13: #{tpu_custom_call.1} parent=1 // pred_fallthru
      _
    // Predicated region
    $region14: #{tpu_custom_call.1} parent=1 // pred_check
      _
    $region15: #{tpu_custom_call.1} parent=1 // pred_check_branch
      %26 = sbr.rel (0) target = $region17
    $region16: #{tpu_custom_call.1} parent=1 // pred_region
      %s28 = ssub.s32 4096, 4096
      %29 = vsyncadd [#allocation3], %s28
      %s30 = sshll.u32 [#allocation2], 4
      %s31 = int_to_ptr.vmem [resolvable:$true] %s30
      %36 = dma.hbm_to_vmem [thread:$0]  %s3, 4096, %s31, [#allocation3], 128, 128, 8
    $region17: #{tpu_custom_call.1} parent=1 // pred_fallthru
      _
    // Predicated region
    $region18: #{tpu_custom_call.1} parent=1 // pred_check
      _
    $region19: #{tpu_custom_call.1} parent=1 // pred_check_branch
      %38 = sbr.rel (0) target = $region21
    $region20: #{tpu_custom_call.1} parent=1 // pred_region
      _
    $region21: #{tpu_custom_call.1} parent=1 // pred_fallthru
      _
    // Predicated region
    $region22: #{tpu_custom_call.1} parent=1 // pred_check
      _
    $region23: #{tpu_custom_call.1} parent=1 // pred_check_branch
      %40 = sbr.rel (0) target = $region25
    $region24: #{tpu_custom_call.1} parent=1 // pred_region
      %s42 = ssub.s32 4096, 4096
      %43 = vsyncadd [#allocation6], %s42
      %s44 = sshll.u32 [#allocation5], 4
      %s45 = int_to_ptr.vmem [resolvable:$true] %s44
      %50 = dma.hbm_to_vmem [thread:$0]  %s5, 4096, %s45, [#allocation6], 128, 128, 8
    $region25: #{tpu_custom_call.1} parent=1 // pred_fallthru
      _
    // Predicated region
    $region26: #{tpu_custom_call.1} parent=1 // pred_check
      _
    $region27: #{tpu_custom_call.1} parent=1 // pred_check_branch
      %52 = sbr.rel (0) target = $region29
    $region28: #{tpu_custom_call.1} parent=1 // pred_region
      _
    $region29: #{tpu_custom_call.1} parent=1 // pred_fallthru
      _
    // Predicated region
    $region30: #{tpu_custom_call.1} parent=1 // pred_check
      _
    $region31: #{tpu_custom_call.1} parent=1 // pred_check_branch
      %54 = sbr.rel (0) target = $region33
    $region32: #{tpu_custom_call.1} parent=1 // pred_region
      %s56 = ssub.s32 2048, 2048
      %57 = vsyncadd [#allocation6], %s56
      %s58 = sshll.u32 [#allocation7], 4
      %s59 = int_to_ptr.vmem [resolvable:$true] %s58
      %64 = dma.hbm_to_vmem [thread:$0]  %s7, 2048, %s59, [#allocation6], 64, 64, 4
    $region33: #{tpu_custom_call.1} parent=1 // pred_fallthru
      _
    // Predicated region
    $region34: #{tpu_custom_call.1} parent=1 // pred_check
      _
    $region35: #{tpu_custom_call.1} parent=1 // pred_check_branch
      %66 = sbr.rel (0) target = $region37
    $region36: #{tpu_custom_call.1} parent=1 // pred_region
      _
    $region37: #{tpu_custom_call.1} parent=1 // pred_fallthru
      _
    // Predicated region
    $region38: #{tpu_custom_call.1} parent=1 // pred_check
      _
    $region39: #{tpu_custom_call.1} parent=1 // pred_check_branch
      %68 = sbr.rel (0) target = $region41
    $region40: #{tpu_custom_call.1} parent=1 // pred_region
      _
    $region41: #{tpu_custom_call.1} parent=1 // pred_fallthru
      _
    // Predicated region
    $region42: #{tpu_custom_call.1} parent=1 // pred_check
      _
    $region43: #{tpu_custom_call.1} parent=1 // pred_check_branch
      %70 = sbr.rel (0) target = $region45
    $region44: #{tpu_custom_call.1} parent=1 // pred_region
      _
    $region45: #{tpu_custom_call.1} parent=1 // pred_fallthru
      _
    // Predicated region
    $region46: #{tpu_custom_call.1} parent=1 // pred_check
      _
    $region47: #{tpu_custom_call.1} parent=1 // pred_check_branch
      %72 = sbr.rel (0) target = $region49
    $region48: #{tpu_custom_call.1} parent=1 // pred_region
      %73 = dma.done [#allocation3], 4096
    $region49: #{tpu_custom_call.1} parent=1 // pred_fallthru
      _
    // Predicated region
    $region50: #{tpu_custom_call.1} parent=1 // pred_check
      _
    $region51: #{tpu_custom_call.1} parent=1 // pred_check_branch
      %75 = sbr.rel (0) target = $region53
    $region52: #{tpu_custom_call.1} parent=1 // pred_region
      %76 = dma.done [#allocation6], 4096
    $region53: #{tpu_custom_call.1} parent=1 // pred_fallthru
      _
    // Predicated region
    $region54: #{tpu_custom_call.1} parent=1 // pred_check
      _
    $region55: #{tpu_custom_call.1} parent=1 // pred_check_branch
      %78 = sbr.rel (0) target = $region57
    $region56: #{tpu_custom_call.1} parent=1 // pred_region
      %79 = dma.done [#allocation6], 2048
    $region57: #{tpu_custom_call.1} parent=1 // pred_fallthru
      _
    %v81 = vld [vmem:[%s0] sm:$0xff]
    %v82 = vpack.c.bf16 %v81, %v81
    %v83 = vld [vmem:[%s1] sm:$0xff]
    %v84 = vld [vmem:[%s1 + $0x8] sm:$0xff]
    %v85 = vld [vmem:[%s1 + $0x10] sm:$0xff]
    %v86 = vld [vmem:[%s1 + $0x18] sm:$0xff]
    %v87 = vld [vmem:[%s1 + $0x20] sm:$0xff]
    %v88 = vld [vmem:[%s1 + $0x28] sm:$0xff]
    %v89 = vld [vmem:[%s2] sm:$0x3]
    %v91 = vlaneseq
    %v92 = vshrl.u32 %v91, 7
    %v93 = vsub.s32 0, %v92
    %v94 = vrot.slane %v89, %v93
    %v95 = vlaneseq
    %v96 = vshrl.u32 %v95, 7
    %v97 = vsub.s32 1, %v96
    %v98 = vrot.slane %v89, %v97
    %v107 = vunpack.c.l.b16 %v83
    %v108 = vunpack.c.h.b16 %v83
    %v109 = vunpack.c.l.b16 %v84
    %v110 = vunpack.c.h.b16 %v84
    %v111 = vunpack.c.l.b16 %v85
    %v112 = vunpack.c.h.b16 %v85
    %v113 = vunpack.c.l.b16 %v86
    %v114 = vunpack.c.h.b16 %v86
    %v115 = vunpack.c.l.b16 %v87
    %v116 = vunpack.c.h.b16 %v87
    %v117 = vunpack.c.l.b16 %v88
    %v118 = vunpack.c.h.b16 %v88
    %v119 = vpack.c.b16 %v109, %v107
    %v120 = vpack.c.b16 %v110, %v108
    %v121 = vpack.c.b16 %v113, %v111
    %v122 = vpack.c.b16 %v114, %v112
    %v123 = vpack.c.b16 %v117, %v115
    %v124 = vpack.c.b16 %v118, %v116
    %vm131 = vcmask 392192
    %v133 = vsel %vm131, %v82, 0
    %135 = vmatprep.subr.bf16.mxu0 %v120
    %136 = vmatpush1.bf16.msra.mxu0 %v119
    %137 = vmatprep.subr.bf16.mxu0 %v122
    %138 = vmatpush1.bf16.msra.mxu0 %v121
    %139 = vmatprep.subr.bf16.mxu0 %v124
    %140 = vmatpush1.bf16.msra.mxu0 %v123
    %141 = vmatprep.subr.bf16.mxu0 0
    %142 = vmatpush1.bf16.msra.mxu0 0
    %143 = vmatprep.subr.bf16.mxu0 0
    %144 = vmatpush1.bf16.msra.mxu0 0
    %145 = vmatprep.subr.bf16.mxu0 0
    %146 = vmatpush1.bf16.msra.mxu0 0
    %147 = vmatprep.subr.bf16.mxu0 0
    %148 = vmatpush1.bf16.msra.mxu0 0
    %149 = vmatprep.subr.bf16.mxu0 0
    %150 = vmatpush1.bf16.msra.mxu0 0
    %151 = vmatprep.subr.bf16.mxu0 0
    %152 = vmatpush1.bf16.msra.mxu0 0
    %153 = vmatprep.subr.bf16.mxu0 0
    %154 = vmatpush1.bf16.msra.mxu0 0
    %155 = vmatprep.subr.bf16.mxu0 0
    %156 = vmatpush1.bf16.msra.mxu0 0
    %157 = vmatprep.subr.bf16.mxu0 0
    %158 = vmatpush1.bf16.msra.mxu0 0
    %159 = vmatprep.subr.bf16.mxu0 0
    %160 = vmatpush1.bf16.msra.mxu0 0
    %161 = vmatprep.subr.bf16.mxu0 0
    %162 = vmatpush1.bf16.msra.mxu0 0
    %163 = vmatprep.subr.bf16.mxu0 0
    %164 = vmatpush1.bf16.msra.mxu0 0
    %165 = vmatprep.subr.bf16.mxu0 0
    %166 = vmatpush1.bf16.msra.mxu0 0
    %167 = vmatprep.mubr.bf16.mxu0 0
    %168 = vmatmul.mubr.bf16.gmra.mrb[0].mxu0 %v133
    %v169 = vpop.f32.mrb[0].mxu0
    %v170 = vadd.f32 %v94, %v169
    %v171 = vpop.f32.mrb[0].mxu0
    %v172 = vadd.f32 %v98, %v171
    %v173 = vpop.f32.mrb[0].mxu0
    %v174 = vpop.f32.mrb[0].mxu0
    %175 = vdwg.mxu0
    %v176 = vmax.f32 %v170, 0.0
    %v177 = vmax.f32 %v172, 0.0
    %v178 = vpack.c.bf16 %v176, %v176
    %v179 = vpack.c.bf16 %v177, %v177
    %v180 = vld [vmem:[#allocation2] sm:$0xff]
    %v181 = vld [vmem:[#allocation2 + $0x8] sm:$0xff]
    %v182 = vld [vmem:[#allocation2 + $0x10] sm:$0xff]
    %v183 = vld [vmem:[#allocation2 + $0x18] sm:$0xff]
    %v184 = vld [vmem:[#allocation2 + $0x20] sm:$0xff]
    %v185 = vld [vmem:[#allocation2 + $0x28] sm:$0xff]
    %v186 = vld [vmem:[#allocation2 + $0x30] sm:$0xff]
    %v187 = vld [vmem:[#allocation2 + $0x38] sm:$0xff]
    %v188 = vld [vmem:[#allocation2 + $0x40] sm:$0xff]
    %v189 = vld [vmem:[#allocation2 + $0x48] sm:$0xff]
    %v190 = vld [vmem:[#allocation2 + $0x50] sm:$0xff]
    %v191 = vld [vmem:[#allocation2 + $0x58] sm:$0xff]
    %v192 = vld [vmem:[#allocation2 + $0x60] sm:$0xff]
    %v193 = vld [vmem:[#allocation2 + $0x68] sm:$0xff]
    %v194 = vld [vmem:[#allocation2 + $0x70] sm:$0xff]
    %v195 = vld [vmem:[#allocation2 + $0x78] sm:$0xff]
    %v196 = vld [vmem:[#allocation2 + $0x80] sm:$0xff]
    %v197 = vld [vmem:[#allocation2 + $0x88] sm:$0xff]
    %v198 = vld [vmem:[#allocation2 + $0x90] sm:$0xff]
    %v199 = vld [vmem:[#allocation2 + $0x98] sm:$0xff]
    %v200 = vld [vmem:[#allocation2 + $0xa0] sm:$0xff]
    %v201 = vld [vmem:[#allocation2 + $0xa8] sm:$0xff]
    %v202 = vld [vmem:[#allocation2 + $0xb0] sm:$0xff]
    %v203 = vld [vmem:[#allocation2 + $0xb8] sm:$0xff]
    %v204 = vld [vmem:[#allocation2 + $0xc0] sm:$0xff]
    %v205 = vld [vmem:[#allocation2 + $0xc8] sm:$0xff]
    %v206 = vld [vmem:[#allocation2 + $0xd0] sm:$0xff]
    %v207 = vld [vmem:[#allocation2 + $0xd8] sm:$0xff]
    %v208 = vld [vmem:[#allocation2 + $0xe0] sm:$0xff]
    %v209 = vld [vmem:[#allocation2 + $0xe8] sm:$0xff]
    %v210 = vld [vmem:[#allocation2 + $0xf0] sm:$0xff]
    %v211 = vld [vmem:[#allocation2 + $0xf8] sm:$0xff]
    %v212 = vld [vmem:[%s4] sm:$0x3]
    %v214 = vlaneseq
    %v215 = vshrl.u32 %v214, 7
    %v216 = vsub.s32 0, %v215
    %v217 = vrot.slane %v212, %v216
    %v218 = vlaneseq
    %v219 = vshrl.u32 %v218, 7
    %v220 = vsub.s32 1, %v219
    %v221 = vrot.slane %v212, %v220
    %v256 = vunpack.c.l.b16 %v180
    %v257 = vunpack.c.h.b16 %v180
    %v258 = vunpack.c.l.b16 %v181
    %v259 = vunpack.c.h.b16 %v181
    %v260 = vunpack.c.l.b16 %v182
    %v261 = vunpack.c.h.b16 %v182
    %v262 = vunpack.c.l.b16 %v183
    %v263 = vunpack.c.h.b16 %v183
    %v264 = vunpack.c.l.b16 %v184
    %v265 = vunpack.c.h.b16 %v184
    %v266 = vunpack.c.l.b16 %v185
    %v267 = vunpack.c.h.b16 %v185
    %v268 = vunpack.c.l.b16 %v186
    %v269 = vunpack.c.h.b16 %v186
    %v270 = vunpack.c.l.b16 %v187
    %v271 = vunpack.c.h.b16 %v187
    %v272 = vunpack.c.l.b16 %v188
    %v273 = vunpack.c.h.b16 %v188
    %v274 = vunpack.c.l.b16 %v189
    %v275 = vunpack.c.h.b16 %v189
    %v276 = vunpack.c.l.b16 %v190
    %v277 = vunpack.c.h.b16 %v190
    %v278 = vunpack.c.l.b16 %v191
    %v279 = vunpack.c.h.b16 %v191
    %v280 = vunpack.c.l.b16 %v192
    %v281 = vunpack.c.h.b16 %v192
    %v282 = vunpack.c.l.b16 %v193
    %v283 = vunpack.c.h.b16 %v193
    %v284 = vunpack.c.l.b16 %v194
    %v285 = vunpack.c.h.b16 %v194
    %v286 = vunpack.c.l.b16 %v195
    %v287 = vunpack.c.h.b16 %v195
    %v288 = vunpack.c.l.b16 %v196
    %v289 = vunpack.c.h.b16 %v196
    %v290 = vunpack.c.l.b16 %v197
    %v291 = vunpack.c.h.b16 %v197
    %v292 = vunpack.c.l.b16 %v198
    %v293 = vunpack.c.h.b16 %v198
    %v294 = vunpack.c.l.b16 %v199
    %v295 = vunpack.c.h.b16 %v199
    %v296 = vunpack.c.l.b16 %v200
    %v297 = vunpack.c.h.b16 %v200
    %v298 = vunpack.c.l.b16 %v201
    %v299 = vunpack.c.h.b16 %v201
    %v300 = vunpack.c.l.b16 %v202
    %v301 = vunpack.c.h.b16 %v202
    %v302 = vunpack.c.l.b16 %v203
    %v303 = vunpack.c.h.b16 %v203
    %v304 = vunpack.c.l.b16 %v204
    %v305 = vunpack.c.h.b16 %v204
    %v306 = vunpack.c.l.b16 %v205
    %v307 = vunpack.c.h.b16 %v205
    %v308 = vunpack.c.l.b16 %v206
    %v309 = vunpack.c.h.b16 %v206
    %v310 = vunpack.c.l.b16 %v207
    %v311 = vunpack.c.h.b16 %v207
    %v312 = vunpack.c.l.b16 %v208
    %v313 = vunpack.c.h.b16 %v208
    %v314 = vunpack.c.l.b16 %v209
    %v315 = vunpack.c.h.b16 %v209
    %v316 = vunpack.c.l.b16 %v210
    %v317 = vunpack.c.h.b16 %v210
    %v318 = vunpack.c.l.b16 %v211
    %v319 = vunpack.c.h.b16 %v211
    %v320 = vpack.c.b16 %v258, %v256
    %v321 = vpack.c.b16 %v259, %v257
    %v322 = vpack.c.b16 %v262, %v260
    %v323 = vpack.c.b16 %v263, %v261
    %v324 = vpack.c.b16 %v266, %v264
    %v325 = vpack.c.b16 %v267, %v265
    %v326 = vpack.c.b16 %v270, %v268
    %v327 = vpack.c.b16 %v271, %v269
    %v328 = vpack.c.b16 %v274, %v272
    %v329 = vpack.c.b16 %v275, %v273
    %v330 = vpack.c.b16 %v278, %v276
    %v331 = vpack.c.b16 %v279, %v277
    %v332 = vpack.c.b16 %v282, %v280
    %v333 = vpack.c.b16 %v283, %v281
    %v334 = vpack.c.b16 %v286, %v284
    %v335 = vpack.c.b16 %v287, %v285
    %v336 = vpack.c.b16 %v290, %v288
    %v337 = vpack.c.b16 %v291, %v289
    %v338 = vpack.c.b16 %v294, %v292
    %v339 = vpack.c.b16 %v295, %v293
    %v340 = vpack.c.b16 %v298, %v296
    %v341 = vpack.c.b16 %v299, %v297
    %v342 = vpack.c.b16 %v302, %v300
    %v343 = vpack.c.b16 %v303, %v301
    %v344 = vpack.c.b16 %v306, %v304
    %v345 = vpack.c.b16 %v307, %v305
    %v346 = vpack.c.b16 %v310, %v308
    %v347 = vpack.c.b16 %v311, %v309
    %v348 = vpack.c.b16 %v314, %v312
    %v349 = vpack.c.b16 %v315, %v313
    %v350 = vpack.c.b16 %v318, %v316
    %v351 = vpack.c.b16 %v319, %v317
    %384 = vmatprep.subr.bf16.mxu0 %v321
    %385 = vmatpush1.bf16.msra.mxu0 %v320
    %386 = vmatprep.subr.bf16.mxu0 %v323
    %387 = vmatpush1.bf16.msra.mxu0 %v322
    %388 = vmatprep.subr.bf16.mxu0 %v325
    %389 = vmatpush1.bf16.msra.mxu0 %v324
    %390 = vmatprep.subr.bf16.mxu0 %v327
    %391 = vmatpush1.bf16.msra.mxu0 %v326
    %392 = vmatprep.subr.bf16.mxu0 %v329
    %393 = vmatpush1.bf16.msra.mxu0 %v328
    %394 = vmatprep.subr.bf16.mxu0 %v331
    %395 = vmatpush1.bf16.msra.mxu0 %v330
    %396 = vmatprep.subr.bf16.mxu0 %v333
    %397 = vmatpush1.bf16.msra.mxu0 %v332
    %398 = vmatprep.subr.bf16.mxu0 %v335
    %399 = vmatpush1.bf16.msra.mxu0 %v334
    %400 = vmatprep.subr.bf16.mxu0 %v337
    %401 = vmatpush1.bf16.msra.mxu0 %v336
    %402 = vmatprep.subr.bf16.mxu0 %v339
    %403 = vmatpush1.bf16.msra.mxu0 %v338
    %404 = vmatprep.subr.bf16.mxu0 %v341
    %405 = vmatpush1.bf16.msra.mxu0 %v340
    %406 = vmatprep.subr.bf16.mxu0 %v343
    %407 = vmatpush1.bf16.msra.mxu0 %v342
    %408 = vmatprep.subr.bf16.mxu0 %v345
    %409 = vmatpush1.bf16.msra.mxu0 %v344
    %410 = vmatprep.subr.bf16.mxu0 %v347
    %411 = vmatpush1.bf16.msra.mxu0 %v346
    %412 = vmatprep.subr.bf16.mxu0 %v349
    %413 = vmatpush1.bf16.msra.mxu0 %v348
    %414 = vmatprep.subr.bf16.mxu0 %v351
    %415 = vmatpush1.bf16.msra.mxu0 %v350
    %416 = vmatprep.mubr.bf16.mxu0 %v179
    %417 = vmatmul.mubr.bf16.gmra.mrb[0].mxu0 %v178
    %v418 = vpop.f32.mrb[0].mxu0
    %v419 = vadd.f32 %v217, %v418
    %v420 = vpop.f32.mrb[0].mxu0
    %v421 = vadd.f32 %v221, %v420
    %v422 = vpop.f32.mrb[0].mxu0
    %v423 = vpop.f32.mrb[0].mxu0
    %424 = vdwg.mxu0
    %v425 = vmax.f32 %v419, 0.0
    %v426 = vmax.f32 %v421, 0.0
    %v427 = vpack.c.bf16 %v425, %v425
    %v428 = vpack.c.bf16 %v426, %v426
    %v429 = vld [vmem:[#allocation5] sm:$0xff]
    %v430 = vld [vmem:[#allocation5 + $0x8] sm:$0xff]
    %v431 = vld [vmem:[#allocation5 + $0x10] sm:$0xff]
    %v432 = vld [vmem:[#allocation5 + $0x18] sm:$0xff]
    %v433 = vld [vmem:[#allocation5 + $0x20] sm:$0xff]
    %v434 = vld [vmem:[#allocation5 + $0x28] sm:$0xff]
    %v435 = vld [vmem:[#allocation5 + $0x30] sm:$0xff]
    %v436 = vld [vmem:[#allocation5 + $0x38] sm:$0xff]
    %v437 = vld [vmem:[#allocation5 + $0x40] sm:$0xff]
    %v438 = vld [vmem:[#allocation5 + $0x48] sm:$0xff]
    %v439 = vld [vmem:[#allocation5 + $0x50] sm:$0xff]
    %v440 = vld [vmem:[#allocation5 + $0x58] sm:$0xff]
    %v441 = vld [vmem:[#allocation5 + $0x60] sm:$0xff]
    %v442 = vld [vmem:[#allocation5 + $0x68] sm:$0xff]
    %v443 = vld [vmem:[#allocation5 + $0x70] sm:$0xff]
    %v444 = vld [vmem:[#allocation5 + $0x78] sm:$0xff]
    %v445 = vld [vmem:[#allocation5 + $0x80] sm:$0xff]
    %v446 = vld [vmem:[#allocation5 + $0x88] sm:$0xff]
    %v447 = vld [vmem:[#allocation5 + $0x90] sm:$0xff]
    %v448 = vld [vmem:[#allocation5 + $0x98] sm:$0xff]
    %v449 = vld [vmem:[#allocation5 + $0xa0] sm:$0xff]
    %v450 = vld [vmem:[#allocation5 + $0xa8] sm:$0xff]
    %v451 = vld [vmem:[#allocation5 + $0xb0] sm:$0xff]
    %v452 = vld [vmem:[#allocation5 + $0xb8] sm:$0xff]
    %v453 = vld [vmem:[#allocation5 + $0xc0] sm:$0xff]
    %v454 = vld [vmem:[#allocation5 + $0xc8] sm:$0xff]
    %v455 = vld [vmem:[#allocation5 + $0xd0] sm:$0xff]
    %v456 = vld [vmem:[#allocation5 + $0xd8] sm:$0xff]
    %v457 = vld [vmem:[#allocation5 + $0xe0] sm:$0xff]
    %v458 = vld [vmem:[#allocation5 + $0xe8] sm:$0xff]
    %v459 = vld [vmem:[#allocation5 + $0xf0] sm:$0xff]
    %v460 = vld [vmem:[#allocation5 + $0xf8] sm:$0xff]
    %v461 = vld [vmem:[%s6] sm:$0x3]
    %v463 = vlaneseq
    %v464 = vshrl.u32 %v463, 7
    %v465 = vsub.s32 0, %v464
    %v466 = vrot.slane %v461, %v465
    %v467 = vlaneseq
    %v468 = vshrl.u32 %v467, 7
    %v469 = vsub.s32 1, %v468
    %v470 = vrot.slane %v461, %v469
    %v505 = vunpack.c.l.b16 %v429
    %v506 = vunpack.c.h.b16 %v429
    %v507 = vunpack.c.l.b16 %v430
    %v508 = vunpack.c.h.b16 %v430
    %v509 = vunpack.c.l.b16 %v431
    %v510 = vunpack.c.h.b16 %v431
    %v511 = vunpack.c.l.b16 %v432
    %v512 = vunpack.c.h.b16 %v432
    %v513 = vunpack.c.l.b16 %v433
    %v514 = vunpack.c.h.b16 %v433
    %v515 = vunpack.c.l.b16 %v434
    %v516 = vunpack.c.h.b16 %v434
    %v517 = vunpack.c.l.b16 %v435
    %v518 = vunpack.c.h.b16 %v435
    %v519 = vunpack.c.l.b16 %v436
    %v520 = vunpack.c.h.b16 %v436
    %v521 = vunpack.c.l.b16 %v437
    %v522 = vunpack.c.h.b16 %v437
    %v523 = vunpack.c.l.b16 %v438
    %v524 = vunpack.c.h.b16 %v438
    %v525 = vunpack.c.l.b16 %v439
    %v526 = vunpack.c.h.b16 %v439
    %v527 = vunpack.c.l.b16 %v440
    %v528 = vunpack.c.h.b16 %v440
    %v529 = vunpack.c.l.b16 %v441
    %v530 = vunpack.c.h.b16 %v441
    %v531 = vunpack.c.l.b16 %v442
    %v532 = vunpack.c.h.b16 %v442
    %v533 = vunpack.c.l.b16 %v443
    %v534 = vunpack.c.h.b16 %v443
    %v535 = vunpack.c.l.b16 %v444
    %v536 = vunpack.c.h.b16 %v444
    %v537 = vunpack.c.l.b16 %v445
    %v538 = vunpack.c.h.b16 %v445
    %v539 = vunpack.c.l.b16 %v446
    %v540 = vunpack.c.h.b16 %v446
    %v541 = vunpack.c.l.b16 %v447
    %v542 = vunpack.c.h.b16 %v447
    %v543 = vunpack.c.l.b16 %v448
    %v544 = vunpack.c.h.b16 %v448
    %v545 = vunpack.c.l.b16 %v449
    %v546 = vunpack.c.h.b16 %v449
    %v547 = vunpack.c.l.b16 %v450
    %v548 = vunpack.c.h.b16 %v450
    %v549 = vunpack.c.l.b16 %v451
    %v550 = vunpack.c.h.b16 %v451
    %v551 = vunpack.c.l.b16 %v452
    %v552 = vunpack.c.h.b16 %v452
    %v553 = vunpack.c.l.b16 %v453
    %v554 = vunpack.c.h.b16 %v453
    %v555 = vunpack.c.l.b16 %v454
    %v556 = vunpack.c.h.b16 %v454
    %v557 = vunpack.c.l.b16 %v455
    %v558 = vunpack.c.h.b16 %v455
    %v559 = vunpack.c.l.b16 %v456
    %v560 = vunpack.c.h.b16 %v456
    %v561 = vunpack.c.l.b16 %v457
    %v562 = vunpack.c.h.b16 %v457
    %v563 = vunpack.c.l.b16 %v458
    %v564 = vunpack.c.h.b16 %v458
    %v565 = vunpack.c.l.b16 %v459
    %v566 = vunpack.c.h.b16 %v459
    %v567 = vunpack.c.l.b16 %v460
    %v568 = vunpack.c.h.b16 %v460
    %v569 = vpack.c.b16 %v507, %v505
    %v570 = vpack.c.b16 %v508, %v506
    %v571 = vpack.c.b16 %v511, %v509
    %v572 = vpack.c.b16 %v512, %v510
    %v573 = vpack.c.b16 %v515, %v513
    %v574 = vpack.c.b16 %v516, %v514
    %v575 = vpack.c.b16 %v519, %v517
    %v576 = vpack.c.b16 %v520, %v518
    %v577 = vpack.c.b16 %v523, %v521
    %v578 = vpack.c.b16 %v524, %v522
    %v579 = vpack.c.b16 %v527, %v525
    %v580 = vpack.c.b16 %v528, %v526
    %v581 = vpack.c.b16 %v531, %v529
    %v582 = vpack.c.b16 %v532, %v530
    %v583 = vpack.c.b16 %v535, %v533
    %v584 = vpack.c.b16 %v536, %v534
    %v585 = vpack.c.b16 %v539, %v537
    %v586 = vpack.c.b16 %v540, %v538
    %v587 = vpack.c.b16 %v543, %v541
    %v588 = vpack.c.b16 %v544, %v542
    %v589 = vpack.c.b16 %v547, %v545
    %v590 = vpack.c.b16 %v548, %v546
    %v591 = vpack.c.b16 %v551, %v549
    %v592 = vpack.c.b16 %v552, %v550
    %v593 = vpack.c.b16 %v555, %v553
    %v594 = vpack.c.b16 %v556, %v554
    %v595 = vpack.c.b16 %v559, %v557
    %v596 = vpack.c.b16 %v560, %v558
    %v597 = vpack.c.b16 %v563, %v561
    %v598 = vpack.c.b16 %v564, %v562
    %v599 = vpack.c.b16 %v567, %v565
    %v600 = vpack.c.b16 %v568, %v566
    %633 = vmatprep.subr.bf16.mxu0 %v570
    %634 = vmatpush1.bf16.msra.mxu0 %v569
    %635 = vmatprep.subr.bf16.mxu0 %v572
    %636 = vmatpush1.bf16.msra.mxu0 %v571
    %637 = vmatprep.subr.bf16.mxu0 %v574
    %638 = vmatpush1.bf16.msra.mxu0 %v573
    %639 = vmatprep.subr.bf16.mxu0 %v576
    %640 = vmatpush1.bf16.msra.mxu0 %v575
    %641 = vmatprep.subr.bf16.mxu0 %v578
    %642 = vmatpush1.bf16.msra.mxu0 %v577
    %643 = vmatprep.subr.bf16.mxu0 %v580
    %644 = vmatpush1.bf16.msra.mxu0 %v579
    %645 = vmatprep.subr.bf16.mxu0 %v582
    %646 = vmatpush1.bf16.msra.mxu0 %v581
    %647 = vmatprep.subr.bf16.mxu0 %v584
    %648 = vmatpush1.bf16.msra.mxu0 %v583
    %649 = vmatprep.subr.bf16.mxu0 %v586
    %650 = vmatpush1.bf16.msra.mxu0 %v585
    %651 = vmatprep.subr.bf16.mxu0 %v588
    %652 = vmatpush1.bf16.msra.mxu0 %v587
    %653 = vmatprep.subr.bf16.mxu0 %v590
    %654 = vmatpush1.bf16.msra.mxu0 %v589
    %655 = vmatprep.subr.bf16.mxu0 %v592
    %656 = vmatpush1.bf16.msra.mxu0 %v591
    %657 = vmatprep.subr.bf16.mxu0 %v594
    %658 = vmatpush1.bf16.msra.mxu0 %v593
    %659 = vmatprep.subr.bf16.mxu0 %v596
    %660 = vmatpush1.bf16.msra.mxu0 %v595
    %661 = vmatprep.subr.bf16.mxu0 %v598
    %662 = vmatpush1.bf16.msra.mxu0 %v597
    %663 = vmatprep.subr.bf16.mxu0 %v600
    %664 = vmatpush1.bf16.msra.mxu0 %v599
    %665 = vmatprep.mubr.bf16.mxu0 %v428
    %666 = vmatmul.mubr.bf16.gmra.mrb[0].mxu0 %v427
    %v667 = vpop.f32.mrb[0].mxu0
    %v668 = vadd.f32 %v466, %v667
    %v669 = vpop.f32.mrb[0].mxu0
    %v670 = vadd.f32 %v470, %v669
    %v671 = vpop.f32.mrb[0].mxu0
    %v672 = vpop.f32.mrb[0].mxu0
    %673 = vdwg.mxu0
    %v674 = vmax.f32 %v668, 0.0
    %v675 = vmax.f32 %v670, 0.0
    %v676 = vpack.c.bf16 %v674, %v674
    %v677 = vpack.c.bf16 %v675, %v675
    %v678 = vld [vmem:[#allocation7] sm:$0xf]
    %v679 = vld [vmem:[#allocation7 + $0x4] sm:$0xf]
    %v680 = vld [vmem:[#allocation7 + $0x8] sm:$0xf]
    %v681 = vld [vmem:[#allocation7 + $0xc] sm:$0xf]
    %v682 = vld [vmem:[#allocation7 + $0x10] sm:$0xf]
    %v683 = vld [vmem:[#allocation7 + $0x14] sm:$0xf]
    %v684 = vld [vmem:[#allocation7 + $0x18] sm:$0xf]
    %v685 = vld [vmem:[#allocation7 + $0x1c] sm:$0xf]
    %v686 = vld [vmem:[#allocation7 + $0x20] sm:$0xf]
    %v687 = vld [vmem:[#allocation7 + $0x24] sm:$0xf]
    %v688 = vld [vmem:[#allocation7 + $0x28] sm:$0xf]
    %v689 = vld [vmem:[#allocation7 + $0x2c] sm:$0xf]
    %v690 = vld [vmem:[#allocation7 + $0x30] sm:$0xf]
    %v691 = vld [vmem:[#allocation7 + $0x34] sm:$0xf]
    %v692 = vld [vmem:[#allocation7 + $0x38] sm:$0xf]
    %v693 = vld [vmem:[#allocation7 + $0x3c] sm:$0xf]
    %v694 = vld [vmem:[#allocation7 + $0x40] sm:$0xf]
    %v695 = vld [vmem:[#allocation7 + $0x44] sm:$0xf]
    %v696 = vld [vmem:[#allocation7 + $0x48] sm:$0xf]
    %v697 = vld [vmem:[#allocation7 + $0x4c] sm:$0xf]
    %v698 = vld [vmem:[#allocation7 + $0x50] sm:$0xf]
    %v699 = vld [vmem:[#allocation7 + $0x54] sm:$0xf]
    %v700 = vld [vmem:[#allocation7 + $0x58] sm:$0xf]
    %v701 = vld [vmem:[#allocation7 + $0x5c] sm:$0xf]
    %v702 = vld [vmem:[#allocation7 + $0x60] sm:$0xf]
    %v703 = vld [vmem:[#allocation7 + $0x64] sm:$0xf]
    %v704 = vld [vmem:[#allocation7 + $0x68] sm:$0xf]
    %v705 = vld [vmem:[#allocation7 + $0x6c] sm:$0xf]
    %v706 = vld [vmem:[#allocation7 + $0x70] sm:$0xf]
    %v707 = vld [vmem:[#allocation7 + $0x74] sm:$0xf]
    %v708 = vld [vmem:[#allocation7 + $0x78] sm:$0xf]
    %v709 = vld [vmem:[#allocation7 + $0x7c] sm:$0xf]
    %v710 = vld [vmem:[%s8] sm:$0x1]
    %v712 = vlaneseq
    %v713 = vshrl.u32 %v712, 7
    %v714 = vsub.s32 0, %v713
    %v715 = vrot.slane %v710, %v714
    %v749 = vunpack.c.l.b16 %v678
    %v750 = vunpack.c.l.b16 %v679
    %v751 = vunpack.c.l.b16 %v680
    %v752 = vunpack.c.l.b16 %v681
    %v753 = vunpack.c.l.b16 %v682
    %v754 = vunpack.c.l.b16 %v683
    %v755 = vunpack.c.l.b16 %v684
    %v756 = vunpack.c.l.b16 %v685
    %v757 = vunpack.c.l.b16 %v686
    %v758 = vunpack.c.l.b16 %v687
    %v759 = vunpack.c.l.b16 %v688
    %v760 = vunpack.c.l.b16 %v689
    %v761 = vunpack.c.l.b16 %v690
    %v762 = vunpack.c.l.b16 %v691
    %v763 = vunpack.c.l.b16 %v692
    %v764 = vunpack.c.l.b16 %v693
    %v765 = vunpack.c.l.b16 %v694
    %v766 = vunpack.c.l.b16 %v695
    %v767 = vunpack.c.l.b16 %v696
    %v768 = vunpack.c.l.b16 %v697
    %v769 = vunpack.c.l.b16 %v698
    %v770 = vunpack.c.l.b16 %v699
    %v771 = vunpack.c.l.b16 %v700
    %v772 = vunpack.c.l.b16 %v701
    %v773 = vunpack.c.l.b16 %v702
    %v774 = vunpack.c.l.b16 %v703
    %v775 = vunpack.c.l.b16 %v704
    %v776 = vunpack.c.l.b16 %v705
    %v777 = vunpack.c.l.b16 %v706
    %v778 = vunpack.c.l.b16 %v707
    %v779 = vunpack.c.l.b16 %v708
    %v780 = vunpack.c.l.b16 %v709
    %v781 = vpack.c.b16 %v750, %v749
    %v782 = vpack.c.b16 %v752, %v751
    %v783 = vpack.c.b16 %v754, %v753
    %v784 = vpack.c.b16 %v756, %v755
    %v785 = vpack.c.b16 %v758, %v757
    %v786 = vpack.c.b16 %v760, %v759
    %v787 = vpack.c.b16 %v762, %v761
    %v788 = vpack.c.b16 %v764, %v763
    %v789 = vpack.c.b16 %v766, %v765
    %v790 = vpack.c.b16 %v768, %v767
    %v791 = vpack.c.b16 %v770, %v769
    %v792 = vpack.c.b16 %v772, %v771
    %v793 = vpack.c.b16 %v774, %v773
    %v794 = vpack.c.b16 %v776, %v775
    %v795 = vpack.c.b16 %v778, %v777
    %v796 = vpack.c.b16 %v780, %v779
    %813 = vmatprep.subr.bf16.mxu0 0
    %814 = vmatpush1.bf16.msra.mxu0 %v781
    %815 = vmatprep.subr.bf16.mxu0 0
    %816 = vmatpush1.bf16.msra.mxu0 %v782
    %817 = vmatprep.subr.bf16.mxu0 0
    %818 = vmatpush1.bf16.msra.mxu0 %v783
    %819 = vmatprep.subr.bf16.mxu0 0
    %820 = vmatpush1.bf16.msra.mxu0 %v784
    %821 = vmatprep.subr.bf16.mxu0 0
    %822 = vmatpush1.bf16.msra.mxu0 %v785
    %823 = vmatprep.subr.bf16.mxu0 0
    %824 = vmatpush1.bf16.msra.mxu0 %v786
    %825 = vmatprep.subr.bf16.mxu0 0
    %826 = vmatpush1.bf16.msra.mxu0 %v787
    %827 = vmatprep.subr.bf16.mxu0 0
    %828 = vmatpush1.bf16.msra.mxu0 %v788
    %829 = vmatprep.subr.bf16.mxu0 0
    %830 = vmatpush1.bf16.msra.mxu0 %v789
    %831 = vmatprep.subr.bf16.mxu0 0
    %832 = vmatpush1.bf16.msra.mxu0 %v790
    %833 = vmatprep.subr.bf16.mxu0 0
    %834 = vmatpush1.bf16.msra.mxu0 %v791
    %835 = vmatprep.subr.bf16.mxu0 0
    %836 = vmatpush1.bf16.msra.mxu0 %v792
    %837 = vmatprep.subr.bf16.mxu0 0
    %838 = vmatpush1.bf16.msra.mxu0 %v793
    %839 = vmatprep.subr.bf16.mxu0 0
    %840 = vmatpush1.bf16.msra.mxu0 %v794
    %841 = vmatprep.subr.bf16.mxu0 0
    %842 = vmatpush1.bf16.msra.mxu0 %v795
    %843 = vmatprep.subr.bf16.mxu0 0
    %844 = vmatpush1.bf16.msra.mxu0 %v796
    %845 = vmatprep.mubr.bf16.mxu0 %v677
    %846 = vmatmul.mubr.bf16.gmra.mrb[0].mxu0 %v676
    %v847 = vpop.f32.mrb[0].mxu0
    %v848 = vadd.f32 %v715, %v847
    %v849 = vpop.f32.mrb[0].mxu0
    %v850 = vpop.f32.mrb[0].mxu0
    %v851 = vpop.f32.mrb[0].mxu0
    %852 = vdwg.mxu0
    %v853 = vmax.f32 %v848, 0.0
    %v854 = vpack.c.bf16 %v853, %v853
    %v855 = vld [vmem:[%s9] sm:$0xf]
    %v856 = vld [vmem:[%s9 + $0x4] sm:$0xf]
    %v857 = vld [vmem:[%s9 + $0x8] sm:$0xf]
    %v858 = vld [vmem:[%s9 + $0xc] sm:$0xf]
    %v859 = vld [vmem:[%s9 + $0x10] sm:$0xf]
    %v860 = vld [vmem:[%s9 + $0x14] sm:$0xf]
    %v861 = vld [vmem:[%s9 + $0x18] sm:$0xf]
    %v862 = vld [vmem:[%s9 + $0x1c] sm:$0xf]
    %v863 = vld [vmem:[%s9 + $0x20] sm:$0xf]
    %v864 = vld [vmem:[%s9 + $0x24] sm:$0xf]
    %v865 = vld [vmem:[%s9 + $0x28] sm:$0xf]
    %v866 = vld [vmem:[%s9 + $0x2c] sm:$0xf]
    %v867 = vld [vmem:[%s9 + $0x30] sm:$0xf]
    %v868 = vld [vmem:[%s9 + $0x34] sm:$0xf]
    %v869 = vld [vmem:[%s9 + $0x38] sm:$0xf]
    %v870 = vld [vmem:[%s9 + $0x3c] sm:$0xf]
    %v871 = vld [vmem:[%s10] sm:$0x1]
    %v873 = vlaneseq
    %v874 = vshrl.u32 %v873, 7
    %v875 = vsub.s32 0, %v874
    %v876 = vrot.slane %v871, %v875
    %v894 = vunpack.c.l.b16 %v855
    %v895 = vunpack.c.l.b16 %v856
    %v896 = vunpack.c.l.b16 %v857
    %v897 = vunpack.c.l.b16 %v858
    %v898 = vunpack.c.l.b16 %v859
    %v899 = vunpack.c.l.b16 %v860
    %v900 = vunpack.c.l.b16 %v861
    %v901 = vunpack.c.l.b16 %v862
    %v902 = vunpack.c.l.b16 %v863
    %v903 = vunpack.c.l.b16 %v864
    %v904 = vunpack.c.l.b16 %v865
    %v905 = vunpack.c.l.b16 %v866
    %v906 = vunpack.c.l.b16 %v867
    %v907 = vunpack.c.l.b16 %v868
    %v908 = vunpack.c.l.b16 %v869
    %v909 = vunpack.c.l.b16 %v870
    %v910 = vpack.c.b16 %v895, %v894
    %v911 = vpack.c.b16 %v897, %v896
    %v912 = vpack.c.b16 %v899, %v898
    %v913 = vpack.c.b16 %v901, %v900
    %v914 = vpack.c.b16 %v903, %v902
    %v915 = vpack.c.b16 %v905, %v904
    %v916 = vpack.c.b16 %v907, %v906
    %v917 = vpack.c.b16 %v909, %v908
    %926 = vmatprep.subr.bf16.mxu0 0
    %927 = vmatpush1.bf16.msra.mxu0 %v910
    %928 = vmatprep.subr.bf16.mxu0 0
    %929 = vmatpush1.bf16.msra.mxu0 %v911
    %930 = vmatprep.subr.bf16.mxu0 0
    %931 = vmatpush1.bf16.msra.mxu0 %v912
    %932 = vmatprep.subr.bf16.mxu0 0
    %933 = vmatpush1.bf16.msra.mxu0 %v913
    %934 = vmatprep.subr.bf16.mxu0 0
    %935 = vmatpush1.bf16.msra.mxu0 %v914
    %936 = vmatprep.subr.bf16.mxu0 0
    %937 = vmatpush1.bf16.msra.mxu0 %v915
    %938 = vmatprep.subr.bf16.mxu0 0
    %939 = vmatpush1.bf16.msra.mxu0 %v916
    %940 = vmatprep.subr.bf16.mxu0 0
    %941 = vmatpush1.bf16.msra.mxu0 %v917
    %942 = vmatprep.subr.bf16.mxu0 0
    %943 = vmatpush1.bf16.msra.mxu0 0
    %944 = vmatprep.subr.bf16.mxu0 0
    %945 = vmatpush1.bf16.msra.mxu0 0
    %946 = vmatprep.subr.bf16.mxu0 0
    %947 = vmatpush1.bf16.msra.mxu0 0
    %948 = vmatprep.subr.bf16.mxu0 0
    %949 = vmatpush1.bf16.msra.mxu0 0
    %950 = vmatprep.subr.bf16.mxu0 0
    %951 = vmatpush1.bf16.msra.mxu0 0
    %952 = vmatprep.subr.bf16.mxu0 0
    %953 = vmatpush1.bf16.msra.mxu0 0
    %954 = vmatprep.subr.bf16.mxu0 0
    %955 = vmatpush1.bf16.msra.mxu0 0
    %956 = vmatprep.subr.bf16.mxu0 0
    %957 = vmatpush1.bf16.msra.mxu0 0
    %958 = vmatprep.mubr.bf16.mxu0 0
    %959 = vmatmul.mubr.bf16.gmra.mrb[0].mxu0 %v854
    %v960 = vpop.f32.mrb[0].mxu0
    %v961 = vadd.f32 %v876, %v960
    %v962 = vpop.f32.mrb[0].mxu0
    %v963 = vpop.f32.mrb[0].mxu0
    %v964 = vpop.f32.mrb[0].mxu0
    %965 = vdwg.mxu0
    %vm966 = vcmask 64512
    %v967 = vsel %vm966, %v961, -inf
    %968 = vmax.xlane.f32.xlu0 %v967
    %v969 = vpop.xlane.xlu0 %968
    %v970 = vsub.f32 %v961, %v969
    %v971 = vmul.f32 %v970, 1.442695
    %v972 = vpow.pop %v971
    %v973 = vsel %vm966, %v972, 0.0
    %974 = vadd.xlane.f32.xlu0 %v973
    %v975 = vpop.xlane.xlu0 %974
    %v976 = vlog2.pop %v975
    %v977 = vmul.f32 %v976, 0.6931472
    %v978 = vsub.f32 %v970, %v977
    %979 = vst.msk [vmem:[#allocation8] sm:$0xff] %vm966, %v978
    // Predicated region
    $region58: #{tpu_custom_call.1} parent=1 // pred_check
      _
    $region59: #{tpu_custom_call.1} parent=1 // pred_check_branch
      %981 = sbr.rel (0) target = $region61
    $region60: #{tpu_custom_call.1} parent=1 // pred_region
      %s983 = ssub.s32 128, 128
      %984 = vsyncadd [#allocation4], %s983
      %s986 = sshll.u32 [#allocation8], 4
      %s987 = int_to_ptr.vmem [resolvable:$true] %s986
      %989 = dma.vmem_to_hbm [thread:$0]  %s987, 128, %s11, [#allocation4]
    $region61: #{tpu_custom_call.1} parent=1 // pred_fallthru
      _
    // Predicated region
    $region62: #{tpu_custom_call.1} parent=1 // pred_check
      _
    $region63: #{tpu_custom_call.1} parent=1 // pred_check_branch
      %991 = sbr.rel (0) target = $region65
    $region64: #{tpu_custom_call.1} parent=1 // pred_region
      %992 = dma.done [#allocation4], 128
    $region65: #{tpu_custom_call.1} parent=1 // pred_fallthru
      _
    %993 = vsyncpa [#allocation3], 1
    %994 = vsyncpa [#allocation6], 1
    %995 = vsyncpa [#allocation4], 1

</llo_original>
